<compile_context>
chip_gen: v5e
topology: v5e:2x2
jax: 0.10.0
libtpu: 0.0.40
codegen_flags: <defaults>
</compile_context>

<pallas_src>
import functools

import jax
import jax.numpy as jnp
from jax.experimental import pallas as pl
from jax.experimental.pallas import tpu as pltpu


def _round_up(x, m):
    return ((x + m - 1) // m) * m


def _cdiv(a, b):
    return -(-a // b)


# ---------------------------------------------------------------------------
# Kernels
# ---------------------------------------------------------------------------

def _packed_kernel(half, t_ref, fac_ref, out_ref):
    # Lane-packed small-embed path (2*half < 128, K = 128 // (2*half) steps/row).
    # t_ref:   (TR, 128) f32 -- each step already broadcast across its
    #                           2*half-lane group.
    # fac_ref: (1, 128)  f32 -- [fac | fac] tiled K times along lanes.
    # out_ref: (TR, 128) f32 -- per group: [sin(t*fac) | cos(t*fac)].
    inner = t_ref[...] * fac_ref[...]
    lane = jax.lax.broadcasted_iota(jnp.int32, inner.shape, 1)
    is_sin = (lane % (2 * half)) < half
    out_ref[...] = jnp.where(is_sin, jnp.sin(inner), jnp.cos(inner))


def _split_store_kernel(half, t_ref, fac_ref, out_ref):
    # half % 128 == 0: two lane-aligned, unmasked half-width stores, no concat
    # temporary / extra VMEM copy.
    inner = t_ref[...] * fac_ref[...]          # (TR, half)
    out_ref[:, :half] = jnp.sin(inner)
    out_ref[:, half:] = jnp.cos(inner)


def _concat_kernel(t_ref, fac_ref, out_ref):
    # Generic fallback: build the full row in registers, single store.
    inner = t_ref[...] * fac_ref[...]          # (TR, half)
    out_ref[...] = jnp.concatenate([jnp.sin(inner), jnp.cos(inner)], axis=-1)


# ---------------------------------------------------------------------------
# Wrapper
# ---------------------------------------------------------------------------

def diffusion_step_embedding(t, embed_dim, complex_valued=False, block_b=2048):
    """Pallas implementation of DiffusionStepEmbedding.forward (real path).

    t: (B,) float array of diffusion steps.
    Returns (B, 2*(embed_dim//2)) f32 = concat([sin(t*fac), cos(t*fac)], -1)
    with fac = 10 ** (4 * arange(embed_dim//2) / (embed_dim//2 - 1)).
    """
    if complex_valued:
        # TODO(synk): complex_valued=True (torch.exp(1j*inner)) has no Mosaic
        # complex-dtype equivalent; only the real sin/cos path is implemented.
        raise NotImplementedError("complex_valued=True not supported in Pallas kernel")

    half = embed_dim // 2
    if half < 2:
        raise ValueError("embed_dim must be >= 4 for the real-valued embedding")

    B = t.shape[0]
    t = t.astype(jnp.float32)
    two_half = 2 * half

    # Static frequency table, identical f32 formula to the PyTorch module.
    fac = 10.0 ** (4.0 * jnp.arange(half, dtype=jnp.float32) / (half - 1))

    # Lane-packing only when groups tile 128 lanes exactly with K >= 2.
    lane_pack = (two_half < 128) and (128 % two_half == 0)
    K = (128 // two_half) if lane_pack else 1

    # ---- batch tiling, in kernel rows (each kernel row covers K batch rows) ----
    rows_needed = _cdiv(B, K)
    block_rows = max(8, block_b // K)
    n_tiles = max(1, _cdiv(rows_needed, block_rows))
    if rows_needed > 8:
        n_tiles = max(n_tiles, 2)              # keep both v7x TensorCores busy
    tr = _round_up(_cdiv(rows_needed, n_tiles), 8)
    rows_pad = n_tiles * tr
    b_pad = rows_pad * K

    if lane_pack:
        out_w = K * two_half                   # == 128
        in_w = out_w
        # Per-group frequency pattern [fac | fac], tiled K times along lanes.
        fac_row = jnp.tile(jnp.concatenate([fac, fac]), K).reshape(1, out_w)
        # Pack K steps per kernel row and broadcast each across its lane group.
        t_pad = jnp.zeros((b_pad,), jnp.float32).at[:B].set(t)
        t_in = jnp.repeat(t_pad.reshape(rows_pad, K), two_half, axis=1)
        kernel = functools.partial(_packed_kernel, half)
    else:
        out_w = two_half
        in_w = 1
        fac_row = fac.reshape(1, half)
        t_in = jnp.zeros((rows_pad, 1), jnp.float32).at[:B, 0].set(t)
        if half % 128 == 0:
            kernel = functools.partial(_split_store_kernel, half)
        else:
            kernel = _concat_kernel

    # Advisory cost hint so XLA can overlap this op with neighbours.
    cost = pl.CostEstimate(
        flops=int(rows_pad * out_w),
        transcendentals=int((2 if lane_pack else 1) * rows_pad * out_w),
        bytes_accessed=int(4 * (rows_pad * in_w + fac_row.shape[1] + rows_pad * out_w)),
    )

    # Per-tile VMEM (double-buffered; (TR,1) inputs lane-pad to 128 in VMEM).
    vmem_est = 2 * 4 * tr * (max(in_w, 128) + out_w) + 2 * 4 * 8 * _round_up(fac_row.shape[1], 128)
    compiler_kwargs = dict(dimension_semantics=("parallel",))
    if vmem_est > 12 * 1024 * 1024:            # only needed if tiles get large
        compiler_kwargs["vmem_limit_bytes"] = min(int(vmem_est + (4 << 20)), 100 << 20)

    out = pl.pallas_call(
        kernel,
        out_shape=jax.ShapeDtypeStruct((rows_pad, out_w), jnp.float32),
        grid=(n_tiles,),
        in_specs=[
            pl.BlockSpec((tr, in_w), lambda i: (i, 0)),              # per-tile steps
            pl.BlockSpec((1, fac_row.shape[1]), lambda i: (0, 0)),   # shared fac table
        ],
        out_specs=pl.BlockSpec((tr, out_w), lambda i: (i, 0)),
        compiler_params=pltpu.CompilerParams(**compiler_kwargs),
        cost_estimate=cost,
    )(t_in, fac_row)

    if lane_pack:
        out = out.reshape(b_pad, two_half)     # contiguous un-packing, free in XLA
    return out[:B]


# ---------------------------------------------------------------------------
# Reference + demo
# ---------------------------------------------------------------------------

def _reference(t, embed_dim):
    half = embed_dim // 2
    fac = 10.0 ** (4.0 * jnp.arange(half, dtype=jnp.float32) / (half - 1))
    inner = t.astype(jnp.float32)[:, None] * fac[None, :]
    return jnp.concatenate([jnp.sin(inner), jnp.cos(inner)], axis=-1)


if __name__ == "__main__":
    key = jax.random.PRNGKey(0)

    # Angles reach |t*fac| ~ 1e4, where f32 sin/cos are conditioned only to
    # about |x|*eps_f32 ~ 1e-3; that is the honest bound between Mosaic and XLA
    # transcendental implementations.
    TOL = 2e-3

    # (B, embed_dim) pairs exercising all three kernel paths:
    #   32  -> lane-packed (2*half = 32 < 128, K = 4)
    #   256 -> split-store (half = 128, multiple of 128), 2 parallel tiles
    #   192 -> concat fallback (half = 96)
    for B, embed_dim in ((8, 32), (24, 256), (8, 192)):
        key, sub = jax.random.split(key)
        t = jax.random.uniform(sub, (B,), dtype=jnp.float32, minval=0.0, maxval=1.0)

        out = diffusion_step_embedding(t, embed_dim)
        out = jax.block_until_ready(out)

        ref = _reference(t, embed_dim)
        assert out.shape == (B, 2 * (embed_dim // 2)), out.shape
        max_err = float(jnp.max(jnp.abs(out - ref)))
        assert max_err <= TOL, (B, embed_dim, max_err)

    print("KERNEL_OK")
</pallas_src>

<mosaic_0001>
module attributes {stable_mosaic.version = 11 : i64} {
  func.func @_packed_kernel(%arg0: i32, %arg1: memref<8x128xf32, #tpu.memory_space<vmem>>, %arg2: memref<1x128xf32, #tpu.memory_space<vmem>>, %arg3: memref<8x128xf32, #tpu.memory_space<vmem>>) attributes {dimension_semantics = [#tpu.dimension_semantics<parallel>], iteration_bounds = array<i64: 1>, scalar_prefetch = 0 : i64, scratch_operands = 0 : i64, tpu.core_type = #tpu.core_type<tc>, window_params = [{transform_indices = @transform_0, window_bounds = array<i64: 8, 128>}, {pipeline_mode = #tpu.pipeline_mode<synchronous>, transform_indices = @transform_1, window_bounds = array<i64: 1, 128>}, {transform_indices = @transform_2, window_bounds = array<i64: 8, 128>}]} {
    %c0 = arith.constant 0 : index
    %c0_0 = arith.constant 0 : index
    %0 = vector.load %arg1[%c0, %c0_0] : memref<8x128xf32, #tpu.memory_space<vmem>>, vector<8x128xf32>
    %c0_1 = arith.constant 0 : index
    %c0_2 = arith.constant 0 : index
    %1 = vector.load %arg2[%c0_1, %c0_2] : memref<1x128xf32, #tpu.memory_space<vmem>>, vector<1x128xf32>
    %2 = vector.broadcast %1 : vector<1x128xf32> to vector<8x128xf32>
    %3 = arith.mulf %0, %2 : vector<8x128xf32>
    %4 = tpu.iota {dimensions = array<i32: 1>} : vector<8x128xi32>
    %c32_i32 = arith.constant 32 : i32
    %c0_i32 = arith.constant 0 : i32
    %5 = arith.cmpi eq, %c32_i32, %c0_i32 : i32
    %c1_i32 = arith.constant 1 : i32
    %6 = arith.select %5, %c1_i32, %c32_i32 : i32
    %7 = vector.broadcast %6 : i32 to vector<8x128xi32>
    %8 = arith.remsi %4, %7 : vector<8x128xi32>
    %c0_i32_3 = arith.constant 0 : i32
    %9 = vector.broadcast %c0_i32_3 : i32 to vector<8x128xi32>
    %10 = arith.cmpi ne, %8, %9 : vector<8x128xi32>
    %c0_i32_4 = arith.constant 0 : i32
    %11 = vector.broadcast %c0_i32_4 : i32 to vector<8x128xi32>
    %12 = arith.cmpi slt, %8, %11 : vector<8x128xi32>
    %c0_i32_5 = arith.constant 0 : i32
    %13 = arith.cmpi slt, %6, %c0_i32_5 : i32
    %14 = vector.broadcast %13 : i1 to vector<8x128xi1>
    %15 = vector.broadcast %14 : vector<8x128xi1> to vector<8x128xi1>
    %16 = arith.xori %12, %15 : vector<8x128xi1>
    %17 = arith.andi %16, %10 : vector<8x128xi1>
    %18 = vector.broadcast %6 : i32 to vector<8x128xi32>
    %19 = arith.addi %8, %18 : vector<8x128xi32>
    %20 = arith.select %17, %19, %8 : vector<8x128xi1>, vector<8x128xi32>
    %c16_i32 = arith.constant 16 : i32
    %21 = vector.broadcast %c16_i32 : i32 to vector<8x128xi32>
    %22 = arith.cmpi slt, %20, %21 : vector<8x128xi32>
    %23 = math.sin %3 : vector<8x128xf32>
    %24 = math.cos %3 : vector<8x128xf32>
    %25 = arith.select %22, %23, %24 : vector<8x128xi1>, vector<8x128xf32>
    %c0_6 = arith.constant 0 : index
    %c0_7 = arith.constant 0 : index
    %26 = vector.load %arg3[%c0_6, %c0_7] : memref<8x128xf32, #tpu.memory_space<vmem>>, vector<8x128xf32>
    tpu.vector_store %arg3[%c0_6, %c0_7], %25 {strides = array<i32>} : memref<8x128xf32, #tpu.memory_space<vmem>>, vector<8x128xf32>,
    return
  }
  func.func @transform_0(%arg0: i32) -> (i32, i32) {
    %c0_i32 = arith.constant 0 : i32
    %c0_i32_0 = arith.constant 0 : i32
    return %arg0, %c0_i32 : i32, i32
  }
  func.func @transform_1(%arg0: i32) -> (i32, i32) {
    %c0_i32 = arith.constant 0 : i32
    %c0_i32_0 = arith.constant 0 : i32
    %c0_i32_1 = arith.constant 0 : i32
    return %c0_i32, %c0_i32_0 : i32, i32
  }
  func.func @transform_2(%arg0: i32) -> (i32, i32) {
    %c0_i32 = arith.constant 0 : i32
    %c0_i32_0 = arith.constant 0 : i32
    return %arg0, %c0_i32 : i32, i32
  }
}

</mosaic_0001>

<llo_original>
// kernel: tpu_custom_call.1
$region0: #{tpu_custom_call.1}
  #allocation0 [shape = 'u32[]', space=smem, size = 0x4, offset = 0x4, fixed_abs, tag = 'smem constant byte address 0x4 - core index']
  #allocation1 [shape = 'u32[72,128]{1,0:T(1,128)}', space=vmem, size = 0x9000, scoped, tag = 'internal scratch']
  %s0 = inlined_call_operand.hbm [shape: f32[8,128], index: 0, kind: input, shape index: {}]
  %s1 = inlined_call_operand.hbm [shape: f32[1,128], index: 1, kind: input, shape index: {}]
  %s2 = inlined_call_operand.hbm [shape: f32[8,128], index: 2, kind: output, shape index: {}]
  %s3 = sld [smem:[#allocation0]]
  $region26: #{tpu_custom_call.1} parent=0
    _
  %s5 = ssub.s32 1, %s3
  %s6 = scalar_select 0, %s5, %s3
  $region1: #{tpu_custom_call.1} parent=0
    #allocation2 [shape = 'u8[4096]{0}', space=vmem, size = 0x1000, scoped, tag = 'input window, operand 0, single buffered']
    #allocation3 [shape = 's32[1]{0}', space=sflag, size = 0x4, scoped, tag = 'scoped memory for tpu_custom_call.1']
    #allocation4 [shape = 's32[1]{0}', space=sflag, size = 0x4, scoped, tag = 'scoped memory for tpu_custom_call.1']
    #allocation5 [shape = 'u8[512]{0}', space=vmem, size = 0x400, scoped, tag = 'input window, operand 1, single buffered']
    #allocation6 [shape = 's32[1]{0}', space=sflag, size = 0x4, scoped, tag = 'scoped memory for tpu_custom_call.1']
    #allocation7 [shape = 'u8[4096]{0}', space=vmem, size = 0x1000, scoped, tag = 'output window, operand 0, single buffered']
    %7 = vsyncpa [#allocation3], 0
    %8 = vsyncpa [#allocation6], 0
    %9 = vsyncpa [#allocation4], 0
    // Predicated region
    $region2: #{tpu_custom_call.1} parent=1 // pred_check
      _
    $region3: #{tpu_custom_call.1} parent=1 // pred_check_branch
      %11 = sbr.rel (0) target = $region5
    $region4: #{tpu_custom_call.1} parent=1 // pred_region
      %13 = vsyncadd [#allocation3], 0
      %s15 = sshll.u32 %s0, 4
      %s16 = int_to_ptr.hbm [resolvable:$true] %s15
      %s17 = sshll.u32 [#allocation2], 4
      %s18 = int_to_ptr.vmem [resolvable:$true] %s17
      %20 = dma.hbm_to_vmem [thread:$0]  %s16, 128, %s18, [#allocation3]
    $region5: #{tpu_custom_call.1} parent=1 // pred_fallthru
      _
    // Predicated region
    $region6: #{tpu_custom_call.1} parent=1 // pred_check
      _
    $region7: #{tpu_custom_call.1} parent=1 // pred_check_branch
      %22 = sbr.rel (0) target = $region9
    $region8: #{tpu_custom_call.1} parent=1 // pred_region
      %24 = vsyncadd [#allocation6], 0
      %s26 = sshll.u32 %s1, 4
      %s27 = int_to_ptr.hbm [resolvable:$true] %s26
      %s28 = sshll.u32 [#allocation5], 4
      %s29 = int_to_ptr.vmem [resolvable:$true] %s28
      %31 = dma.hbm_to_vmem [thread:$0]  %s27, 16, %s29, [#allocation6]
    $region9: #{tpu_custom_call.1} parent=1 // pred_fallthru
      _
    // Predicated region
    $region10: #{tpu_custom_call.1} parent=1 // pred_check
      _
    $region11: #{tpu_custom_call.1} parent=1 // pred_check_branch
      %33 = sbr.rel (0) target = $region13
    $region12: #{tpu_custom_call.1} parent=1 // pred_region
      %35 = dma.done [#allocation3], 128
    $region13: #{tpu_custom_call.1} parent=1 // pred_fallthru
      _
    // Predicated region
    $region14: #{tpu_custom_call.1} parent=1 // pred_check
      _
    $region15: #{tpu_custom_call.1} parent=1 // pred_check_branch
      %37 = sbr.rel (0) target = $region17
    $region16: #{tpu_custom_call.1} parent=1 // pred_region
      %39 = dma.done [#allocation6], 16
    $region17: #{tpu_custom_call.1} parent=1 // pred_fallthru
      _
    %v40 = vld [vmem:[#allocation2] sm:$0xff]
    %v41 = vld [vmem:[#allocation5] sm:$0x1]
    %v43 = vperm.slane %v41, 0
    %v45 = vmul.f32 %v40, %v43
    %v46 = vlaneseq
    %v47 = vand.u32 %v46, 127
    %vm48 = vcmp.lt.s32.totalorder %v47, 0
    %v49 = vsub.s32 0, %v47
    %v50 = vsel %vm48, %v49, %v47
    %v51 = vshrl.u32 %v50, 5
    %v52 = vand.u32 %v50, 31
    %v53 = vsub.s32 0, %v52
    %v54 = vsel %vm48, %v53, %v52
    %vm55 = vcmp.ne.s32.totalorder %v54, 0
    %vm56 = vcmp.lt.s32.totalorder %v54, 0
    %vm57 = vmand %vm56, %vm55
    %v58 = vadd.s32 %v54, 32
    %v59 = vsel %vm57, %v58, %v54
    %vm60 = vcmp.lt.s32.totalorder %v59, 16
    %v61 = vand.u32 2147483647, %v45
    %vm62 = vcmp.le.f32.partialorder %v61, 0.7853982
    %vm63 = vcmp.lt.s32.totalorder %v45, 0
    %v64 = vand.u32 %v45, 2139095040
    %v65 = vshrl.u32 %v64, 23
    %v66 = vsub.s32 %v65, 127
    %v67 = vand.u32 2147483647, %v45
    %v68 = vand.u32 %v67, 8388607
    %v69 = vor.u32 %v68, 8388608
    %v70 = vsub.s32 0, %v69
    %v71 = vadd.s32 %v66, 1
    %vm72 = vcmp.gt.s32.totalorder %v71, 0
    %v73 = vsel %vm72, %v71, 0
    %v74 = vshrl.u32 %v73, 5
    %v75 = vand.u32 %v73, 31
    %v76 = vsub.s32 32, %v75
    %v77 = vshrl.u32 683565275, %v76
    %v78 = vshll.u32 683565275, %v75
    %v79 = vshrl.u32 2475754826, %v76
    %v80 = vor.u32 %v78, %v79
    %v81 = vshll.u32 2475754826, %v75
    %v82 = vshrl.u32 2131351028, %v76
    %v83 = vor.u32 %v81, %v82
    %v84 = vshll.u32 2131351028, %v75
    %v85 = vshrl.u32 2102212464, %v76
    %v86 = vor.u32 %v84, %v85
    %v87 = vshll.u32 2102212464, %v75
    %v88 = vshrl.u32 920167782, %v76
    %v89 = vor.u32 %v87, %v88
    %v90 = vshll.u32 920167782, %v75
    %v91 = vshrl.u32 1326507024, %v76
    %v92 = vor.u32 %v90, %v91
    %vm93 = vcmp.lt.s32.totalorder %v74, 1
    %vm94 = vcmp.lt.s32.totalorder %v74, 2
    %vm95 = vcmp.lt.s32.totalorder %v74, 3
    %vm96 = vcmp.lt.s32.totalorder %v74, 4
    %v97 = vsel %vm93, %v77, %v80
    %v98 = vsel %vm96, %v86, 2102212464
    %v99 = vsel %vm95, %v83, %v98
    %v100 = vsel %vm94, %v97, %v99
    %v101 = vsel %vm93, %v80, %v83
    %v102 = vsel %vm96, %v89, 920167782
    %v103 = vsel %vm95, %v86, %v102
    %v104 = vsel %vm94, %v101, %v103
    %v105 = vsel %vm93, %v83, %v86
    %v106 = vsel %vm96, %v92, 1326507024
    %v107 = vsel %vm95, %v89, %v106
    %v108 = vsel %vm94, %v105, %v107
    %v109 = vshll.u32 %v69, 8
    %v110 = vand.u32 %v109, 65535
    %v111 = vshrl.u32 %v109, 16
    %v112 = vand.u32 %v108, 65535
    %v113 = vshrl.u32 %v108, 16
    %v114 = vmul.u32 %v110, %v112
    %v115 = vmul.u32 %v110, %v113
    %v116 = vmul.u32 %v111, %v112
    %v117 = vmul.u32 %v111, %v113
    %v118 = vshll.u32 %v115, 16
    %v119 = vshrl.u32 %v115, 16
    %v120 = vshll.u32 %v116, 16
    %v121 = vshrl.u32 %v116, 16
    %vm122 = vc.u32 %v114, %v118
    %v123 = vsel %vm122, 1, 0
    %v124 = vadd.s32 %v114, %v118
    %v125 = vadd.s32 %v117, %v123
    %vm126 = vc.u32 %v124, %v120
    %v127 = vsel %vm126, 1, 0
    %v128 = vadd.s32 %v124, %v120
    %v129 = vadd.s32 %v125, %v127
    %v130 = vadd.s32 %v129, %v119
    %v131 = vadd.s32 %v130, %v121
    %v132 = vand.u32 %v109, 65535
    %v133 = vshrl.u32 %v109, 16
    %v134 = vand.u32 %v104, 65535
    %v135 = vshrl.u32 %v104, 16
    %v136 = vmul.u32 %v132, %v134
    %v137 = vmul.u32 %v132, %v135
    %v138 = vmul.u32 %v133, %v134
    %v139 = vmul.u32 %v133, %v135
    %v140 = vshll.u32 %v137, 16
    %v141 = vshrl.u32 %v137, 16
    %v142 = vshll.u32 %v138, 16
    %v143 = vshrl.u32 %v138, 16
    %vm144 = vc.u32 %v136, %v140
    %v145 = vsel %vm144, 1, 0
    %v146 = vadd.s32 %v136, %v140
    %v147 = vadd.s32 %v139, %v145
    %vm148 = vc.u32 %v146, %v142
    %v149 = vsel %vm148, 1, 0
    %v150 = vadd.s32 %v146, %v142
    %v151 = vadd.s32 %v147, %v149
    %v152 = vadd.s32 %v151, %v141
    %v153 = vadd.s32 %v152, %v143
    %v154 = vmul.u32 %v109, %v100
    %v155 = vadd.s32 %v131, %v150
    %vm156 = vc.u32 %v131, %v150
    %v157 = vadd.s32 %v153, 1
    %v158 = vsel %vm156, %v157, %v153
    %v159 = vadd.s32 %v154, %v158
    %v160 = vadd.s32 %v159, 536870912
    %v161 = vshrl.u32 %v160, 30
    %v162 = vshll.u32 %v161, 30
    %v163 = vsub.s32 %v159, %v162
    %vm164 = vcmp.lt.s32.totalorder %v163, 0
    %v165 = vsub.s32 0, %v163
    %v166 = vsel %vm164, %v165, %v163
    %v167 = vclz %v166
    %v168 = vsub.s32 %v167, 2
    %vm169 = vcmp.gt.s32.totalorder 0, %v168
    %v170 = vsel %vm169, 0, %v168
    %v171 = vsub.s32 32, %v170
    %v172 = vshll.u32 %v163, %v170
    %v173 = vshrl.u32 %v155, %v171
    %v174 = vor.u32 %v172, %v173
    %v175 = vsub.s32 4294967266, %v170
    %v176 = vadd.s32 %v175, 127
    %v177 = vshll.u32 %v176, 23
    %v178 = vor.u32 4788187, %v177
    %v179 = vand.u32 2147483647, %v178
    %v181 = vcvt.s32.f32 %v174
    %v182 = vmul.f32 %v181, %v179
    %v183 = vxor.u32 %v182, 2147483648
    %v184 = vsel %vm63, %v183, %v182
    %v185 = vsub.s32 4, %v161
    %v186 = vsel %vm63, %v185, %v161
    %v187 = vsel %vm62, %v45, %v184
    %v188 = vsel %vm62, 0, %v186
    %v189 = vmul.f32 %v187, %v187
    %v190 = vmul.f32 %v189, -0.001358992
    %v191 = vadd.f32 %v190, 0.041655596
    %v192 = vmul.f32 %v189, %v191
    %v193 = vadd.f32 %v192, -0.4999988
    %v194 = vmul.f32 %v189, %v193
    %v195 = vadd.f32 1.0, %v194
    %v196 = vmul.f32 %v187, %v187
    %v197 = vmul.f32 %v196, -0.00019511016
    %v198 = vadd.f32 %v197, 0.008332121
    %v199 = vmul.f32 %v196, %v198
    %v200 = vadd.f32 %v199, -0.16666654
    %v201 = vmul.f32 %v196, %v200
    %v202 = vadd.f32 %v201, 1.0
    %v203 = vmul.f32 %v202, %v187
    %vm204 = vweird.f32 %v45
    %v205 = vadd.s32 %v188, 3
    %v206 = vand.u32 %v205, 3
    %vm207 = vcmp.lt.s32.totalorder %v206, 2
    %vm208 = vcmp.eq.s32.totalorder %v206, 0
    %v209 = vxor.u32 %v203, 2147483648
    %v210 = vsel %vm208, %v195, %v209
    %vm211 = vcmp.eq.s32.totalorder %v206, 2
    %v212 = vxor.u32 %v195, 2147483648
    %v213 = vsel %vm211, %v212, %v203
    %v214 = vsel %vm207, %v210, %v213
    %v215 = vsel %vm204, nan, %v214
    %v216 = vand.u32 2147483647, %v45
    %vm217 = vcmp.le.f32.partialorder %v216, 0.7853982
    %vm218 = vcmp.lt.s32.totalorder %v45, 0
    %v219 = vand.u32 %v45, 2139095040
    %v220 = vshrl.u32 %v219, 23
    %v221 = vsub.s32 %v220, 127
    %v222 = vand.u32 2147483647, %v45
    %v223 = vand.u32 %v222, 8388607
    %v224 = vor.u32 %v223, 8388608
    %v225 = vsub.s32 0, %v224
    %v226 = vadd.s32 %v221, 1
    %vm227 = vcmp.gt.s32.totalorder %v226, 0
    %v228 = vsel %vm227, %v226, 0
    %v229 = vshrl.u32 %v228, 5
    %v230 = vand.u32 %v228, 31
    %v231 = vsub.s32 32, %v230
    %v232 = vshrl.u32 683565275, %v231
    %v233 = vshll.u32 683565275, %v230
    %v234 = vshrl.u32 2475754826, %v231
    %v235 = vor.u32 %v233, %v234
    %v236 = vshll.u32 2475754826, %v230
    %v237 = vshrl.u32 2131351028, %v231
    %v238 = vor.u32 %v236, %v237
    %v239 = vshll.u32 2131351028, %v230
    %v240 = vshrl.u32 2102212464, %v231
    %v241 = vor.u32 %v239, %v240
    %v242 = vshll.u32 2102212464, %v230
    %v243 = vshrl.u32 920167782, %v231
    %v244 = vor.u32 %v242, %v243
    %v245 = vshll.u32 920167782, %v230
    %v246 = vshrl.u32 1326507024, %v231
    %v247 = vor.u32 %v245, %v246
    %vm248 = vcmp.lt.s32.totalorder %v229, 1
    %vm249 = vcmp.lt.s32.totalorder %v229, 2
    %vm250 = vcmp.lt.s32.totalorder %v229, 3
    %vm251 = vcmp.lt.s32.totalorder %v229, 4
    %v252 = vsel %vm248, %v232, %v235
    %v253 = vsel %vm251, %v241, 2102212464
    %v254 = vsel %vm250, %v238, %v253
    %v255 = vsel %vm249, %v252, %v254
    %v256 = vsel %vm248, %v235, %v238
    %v257 = vsel %vm251, %v244, 920167782
    %v258 = vsel %vm250, %v241, %v257
    %v259 = vsel %vm249, %v256, %v258
    %v260 = vsel %vm248, %v238, %v241
    %v261 = vsel %vm251, %v247, 1326507024
    %v262 = vsel %vm250, %v244, %v261
    %v263 = vsel %vm249, %v260, %v262
    %v264 = vshll.u32 %v224, 8
    %v265 = vand.u32 %v264, 65535
    %v266 = vshrl.u32 %v264, 16
    %v267 = vand.u32 %v263, 65535
    %v268 = vshrl.u32 %v263, 16
    %v269 = vmul.u32 %v265, %v267
    %v270 = vmul.u32 %v265, %v268
    %v271 = vmul.u32 %v266, %v267
    %v272 = vmul.u32 %v266, %v268
    %v273 = vshll.u32 %v270, 16
    %v274 = vshrl.u32 %v270, 16
    %v275 = vshll.u32 %v271, 16
    %v276 = vshrl.u32 %v271, 16
    %vm277 = vc.u32 %v269, %v273
    %v278 = vsel %vm277, 1, 0
    %v279 = vadd.s32 %v269, %v273
    %v280 = vadd.s32 %v272, %v278
    %vm281 = vc.u32 %v279, %v275
    %v282 = vsel %vm281, 1, 0
    %v283 = vadd.s32 %v279, %v275
    %v284 = vadd.s32 %v280, %v282
    %v285 = vadd.s32 %v284, %v274
    %v286 = vadd.s32 %v285, %v276
    %v287 = vand.u32 %v264, 65535
    %v288 = vshrl.u32 %v264, 16
    %v289 = vand.u32 %v259, 65535
    %v290 = vshrl.u32 %v259, 16
    %v291 = vmul.u32 %v287, %v289
    %v292 = vmul.u32 %v287, %v290
    %v293 = vmul.u32 %v288, %v289
    %v294 = vmul.u32 %v288, %v290
    %v295 = vshll.u32 %v292, 16
    %v296 = vshrl.u32 %v292, 16
    %v297 = vshll.u32 %v293, 16
    %v298 = vshrl.u32 %v293, 16
    %vm299 = vc.u32 %v291, %v295
    %v300 = vsel %vm299, 1, 0
    %v301 = vadd.s32 %v291, %v295
    %v302 = vadd.s32 %v294, %v300
    %vm303 = vc.u32 %v301, %v297
    %v304 = vsel %vm303, 1, 0
    %v305 = vadd.s32 %v301, %v297
    %v306 = vadd.s32 %v302, %v304
    %v307 = vadd.s32 %v306, %v296
    %v308 = vadd.s32 %v307, %v298
    %v309 = vmul.u32 %v264, %v255
    %v310 = vadd.s32 %v286, %v305
    %vm311 = vc.u32 %v286, %v305
    %v312 = vadd.s32 %v308, 1
    %v313 = vsel %vm311, %v312, %v308
    %v314 = vadd.s32 %v309, %v313
    %v315 = vadd.s32 %v314, 536870912
    %v316 = vshrl.u32 %v315, 30
    %v317 = vshll.u32 %v316, 30
    %v318 = vsub.s32 %v314, %v317
    %vm319 = vcmp.lt.s32.totalorder %v318, 0
    %v320 = vsub.s32 0, %v318
    %v321 = vsel %vm319, %v320, %v318
    %v322 = vclz %v321
    %v323 = vsub.s32 %v322, 2
    %vm324 = vcmp.gt.s32.totalorder 0, %v323
    %v325 = vsel %vm324, 0, %v323
    %v326 = vsub.s32 32, %v325
    %v327 = vshll.u32 %v318, %v325
    %v328 = vshrl.u32 %v310, %v326
    %v329 = vor.u32 %v327, %v328
    %v330 = vsub.s32 4294967266, %v325
    %v331 = vadd.s32 %v330, 127
    %v332 = vshll.u32 %v331, 23
    %v333 = vor.u32 4788187, %v332
    %v334 = vand.u32 2147483647, %v333
    %v336 = vcvt.s32.f32 %v329
    %v337 = vmul.f32 %v336, %v334
    %v338 = vxor.u32 %v337, 2147483648
    %v339 = vsel %vm218, %v338, %v337
    %v340 = vsub.s32 4, %v316
    %v341 = vsel %vm218, %v340, %v316
    %v342 = vsel %vm217, %v45, %v339
    %v343 = vsel %vm217, 0, %v341
    %v344 = vmul.f32 %v342, %v342
    %v345 = vmul.f32 %v344, -0.001358992
    %v346 = vadd.f32 %v345, 0.041655596
    %v347 = vmul.f32 %v344, %v346
    %v348 = vadd.f32 %v347, -0.4999988
    %v349 = vmul.f32 %v344, %v348
    %v350 = vadd.f32 1.0, %v349
    %v351 = vmul.f32 %v342, %v342
    %v352 = vmul.f32 %v351, -0.00019511016
    %v353 = vadd.f32 %v352, 0.008332121
    %v354 = vmul.f32 %v351, %v353
    %v355 = vadd.f32 %v354, -0.16666654
    %v356 = vmul.f32 %v351, %v355
    %v357 = vadd.f32 %v356, 1.0
    %v358 = vmul.f32 %v357, %v342
    %vm359 = vweird.f32 %v45
    %v360 = vand.u32 %v343, 3
    %vm361 = vcmp.lt.s32.totalorder %v360, 2
    %vm362 = vcmp.eq.s32.totalorder %v360, 0
    %v363 = vxor.u32 %v358, 2147483648
    %v364 = vsel %vm362, %v350, %v363
    %vm365 = vcmp.eq.s32.totalorder %v360, 2
    %v366 = vxor.u32 %v350, 2147483648
    %v367 = vsel %vm365, %v366, %v358
    %v368 = vsel %vm361, %v364, %v367
    %v369 = vsel %vm359, nan, %v368
    %v370 = vsel %vm60, %v215, %v369
    %371 = vst [vmem:[#allocation7] sm:$0xff] %v370
    // Predicated region
    $region18: #{tpu_custom_call.1} parent=1 // pred_check
      _
    $region19: #{tpu_custom_call.1} parent=1 // pred_check_branch
      %373 = sbr.rel (0) target = $region21
    $region20: #{tpu_custom_call.1} parent=1 // pred_region
      %375 = vsyncadd [#allocation4], 0
      %s377 = sshll.u32 [#allocation7], 4
      %s378 = int_to_ptr.vmem [resolvable:$true] %s377
      %s379 = sshll.u32 %s2, 4
      %s380 = int_to_ptr.hbm [resolvable:$true] %s379
      %382 = dma.vmem_to_hbm [thread:$0]  %s378, 128, %s380, [#allocation4]
    $region21: #{tpu_custom_call.1} parent=1 // pred_fallthru
      _
    // Predicated region
    $region22: #{tpu_custom_call.1} parent=1 // pred_check
      _
    $region23: #{tpu_custom_call.1} parent=1 // pred_check_branch
      %384 = sbr.rel (0) target = $region25
    $region24: #{tpu_custom_call.1} parent=1 // pred_region
      %386 = dma.done [#allocation4], 128
    $region25: #{tpu_custom_call.1} parent=1 // pred_fallthru
      _
    %387 = vsyncpa [#allocation3], 1
    %388 = vsyncpa [#allocation6], 1
    %389 = vsyncpa [#allocation4], 1

</llo_original>
